<compile_context>
chip_gen: v6e
topology: v6e:2x2x1
jax: 0.10.0
libtpu: 0.0.40
codegen_flags: <defaults>
</compile_context>

<pallas_src>
import functools

import jax
import jax.numpy as jnp
from jax.experimental import pallas as pl
from jax.experimental.pallas import tpu as pltpu


def _conv_stats_kernel(x_ref, w_ref, y_ref, psum_ref, psumsq_ref, xcol_ref, *,
                       K, C_in, C_out, B_blk, L_out, L_pool, L_slab, stride, pool,
                       use_bf16):
    """Conv1d for B_blk batch elements (one fused im2col matmul) + partial BN stats."""
    rem = L_out - pool * L_pool           # conv positions dropped by MaxPool's floor
    sp = stride * pool                    # input-row step between pooled outputs of a phase

    # im2col: strided sublane reads written straight into VMEM scratch at static offsets
    # (no concatenates). Rows grouped per batch element, then per pooling phase j, so
    # conv position l = lp*pool + j lives at row b*L_out + j*L_pool + lp.
    for b in range(B_blk):
        row0 = b * L_slab                 # start row of element b inside the flattened x block
        out0 = b * L_out                  # start row of element b inside xcol / y
        for j in range(pool):
            r0 = out0 + j * L_pool
            for k in range(K):
                xcol_ref[r0:r0 + L_pool, k * C_in:(k + 1) * C_in] = x_ref[
                    pl.ds(row0 + stride * j + k, L_pool, stride=sp), :]
        if rem > 0:
            # Tail positions still count toward BN statistics (folded into the same matmul).
            r0 = out0 + pool * L_pool
            for k in range(K):
                xcol_ref[r0:r0 + rem, k * C_in:(k + 1) * C_in] = x_ref[
                    pl.ds(row0 + stride * pool * L_pool + k, rem, stride=stride), :]

    xcol = xcol_ref[...]                  # (B_blk*L_out, K*C_in)
    wv = w_ref[...]                       # (K*C_in, C_out)
    if use_bf16:
        xcol = xcol.astype(jnp.bfloat16)
        wv = wv.astype(jnp.bfloat16)

    # Single MXU matmul fusing all taps, all pooling phases and all B_blk batch elements.
    y = jnp.dot(xcol, wv, preferred_element_type=jnp.float32)   # (B_blk*L_out, C_out)
    # NOTE: conv bias intentionally omitted — cancelled by BN mean subtraction.

    for b in range(B_blk):
        y_ref[b] = y[b * L_out:(b + 1) * L_out, :]

    # Per-block partial BN statistics (combined by a tiny XLA reduction in the wrapper).
    psum_ref[...] = jnp.sum(y, axis=0, keepdims=True).reshape(1, 1, C_out)
    psumsq_ref[...] = jnp.sum(y * y, axis=0, keepdims=True).reshape(1, 1, C_out)


def _bn_relu_pool_kernel(y_ref, scale_ref, shift_ref, o_ref, *, L_pool, pool):
    """BN-apply (precomputed scale/shift) + ReLU + MaxPool on the cached conv output."""
    z = jnp.maximum(y_ref[...] * scale_ref[...] + shift_ref[...], 0.0)
    # Rows are pooling-phase-grouped: MaxPool1d(pool) = max over `pool` contiguous blocks.
    pooled = z[:, 0:L_pool, :]
    for j in range(1, pool):
        pooled = jnp.maximum(pooled, z[:, j * L_pool:(j + 1) * L_pool, :])
    o_ref[...] = pooled.astype(o_ref.dtype)   # channels-last, lane-dense store


def conv_block_1d(x_ncl, w, gamma, beta, *, stride, padding, pool, eps=1e-5,
                  use_bf16_matmul=False):
    """Forward of ConvBlock1D in training mode (batch statistics for BatchNorm).

    x_ncl: (N, C_in, L)   w: (C_out, C_in, K)   gamma/beta: (C_out,)
    Returns (N, C_out, L_pool) with L_pool = ((L + 2*padding - K)//stride + 1) // pool.
    """
    N, C_in, L = x_ncl.shape
    C_out, _, K = w.shape
    L_out = (L + 2 * padding - K) // stride + 1
    L_pool = L_out // pool
    assert L_pool >= 1, "pool_length larger than conv output length"
    L_pad = L + 2 * padding
    L_slab = -(-L_pad // 8) * 8           # sublane-aligned slab per batch element

    # Batch-block size: amortize per-grid-step overhead while keeping tiles ~1-4 MiB
    # (working set must also fit v7x's 64 MiB/TC VMEM).
    bytes_x = L_slab * C_in * 4
    bytes_y = L_out * C_out * 4
    bytes_xcol = L_out * K * C_in * 4
    B_blk = max(1, min(N, 8,
                       (2 << 20) // max(1, bytes_x),
                       (4 << 20) // max(1, bytes_y),
                       (4 << 20) // max(1, bytes_xcol)))
    NB = -(-N // B_blk)
    N_pad = NB * B_blk                    # zero-padded batch elements contribute 0 to stats

    # Channels-last, zero-padded (length + batch + slab alignment), flattened so the
    # kernel does plain 2D strided sublane reads for im2col.
    x_cl = jnp.transpose(x_ncl, (0, 2, 1)).astype(jnp.float32)
    x_cl = jnp.pad(x_cl, ((0, N_pad - N),
                          (padding, padding + (L_slab - L_pad)),
                          (0, 0)))                                   # (N_pad, L_slab, C_in)
    x_flat = x_cl.reshape(N_pad * L_slab, C_in)

    # Taps laid out so im2col column k*C_in + ci multiplies w[co, ci, k].
    w_dtype = jnp.bfloat16 if use_bf16_matmul else jnp.float32
    w2 = jnp.transpose(w, (2, 1, 0)).reshape(K * C_in, C_out).astype(w_dtype)

    # VMEM budget derived from actual tile sizes (clamped for v7x's 64 MiB VMEM/TC).
    vmem1 = int(min(48 << 20, max(16 << 20, 2 * (
        2 * B_blk * bytes_x + 2 * B_blk * bytes_y + B_blk * bytes_xcol
        + 2 * K * C_in * C_out * (2 if use_bf16_matmul else 4) + 16 * C_out * 4))))
    vmem2 = int(min(48 << 20, max(16 << 20, 2 * (
        2 * B_blk * bytes_y + 2 * B_blk * L_pool * C_out * 4 + 8 * C_out * 4))))

    # --- Call 1: conv + partial BN stats (batch axis fully parallel) ---
    kernel1 = functools.partial(
        _conv_stats_kernel, K=K, C_in=C_in, C_out=C_out, B_blk=B_blk,
        L_out=L_out, L_pool=L_pool, L_slab=L_slab, stride=stride, pool=pool,
        use_bf16=use_bf16_matmul)

    y_cache, psum, psumsq = pl.pallas_call(
        kernel1,
        out_shape=(jax.ShapeDtypeStruct((N_pad, L_out, C_out), jnp.float32),
                   jax.ShapeDtypeStruct((NB, 1, C_out), jnp.float32),
                   jax.ShapeDtypeStruct((NB, 1, C_out), jnp.float32)),
        grid=(NB,),
        in_specs=[
            pl.BlockSpec((B_blk * L_slab, C_in), lambda i: (i, 0)),
            pl.BlockSpec((K * C_in, C_out), lambda i: (0, 0)),
        ],
        out_specs=(
            pl.BlockSpec((B_blk, L_out, C_out), lambda i: (i, 0, 0)),
            pl.BlockSpec((1, 1, C_out), lambda i: (i, 0, 0)),
            pl.BlockSpec((1, 1, C_out), lambda i: (i, 0, 0)),
        ),
        scratch_shapes=[pltpu.VMEM((B_blk * L_out, K * C_in), jnp.float32)],
        compiler_params=pltpu.CompilerParams(
            dimension_semantics=("parallel",),
            vmem_limit_bytes=vmem1),
    )(x_flat, w2)

    # Tiny global BN reduction + scale/shift precompute in XLA (hoisted out of the kernels).
    count = float(N * L_out)
    s = jnp.sum(psum, axis=(0, 1))                         # (C_out,)
    ss = jnp.sum(psumsq, axis=(0, 1))                      # (C_out,)
    mean = s / count
    var = jnp.maximum(ss / count - mean * mean, 0.0)       # clamp guards cancellation
    scale = gamma.astype(jnp.float32) * jax.lax.rsqrt(var + eps)
    shift = beta.astype(jnp.float32) - mean * scale

    # --- Call 2: BN apply + ReLU + MaxPool on the cached conv output (parallel) ---
    kernel2 = functools.partial(_bn_relu_pool_kernel, L_pool=L_pool, pool=pool)
    out_nlc = pl.pallas_call(
        kernel2,
        out_shape=jax.ShapeDtypeStruct((N_pad, L_pool, C_out), jnp.float32),
        grid=(NB,),
        in_specs=[
            pl.BlockSpec((B_blk, L_out, C_out), lambda i: (i, 0, 0)),
            pl.BlockSpec((1, C_out), lambda i: (0, 0)),
            pl.BlockSpec((1, C_out), lambda i: (0, 0)),
        ],
        out_specs=pl.BlockSpec((B_blk, L_pool, C_out), lambda i: (i, 0, 0)),
        compiler_params=pltpu.CompilerParams(
            dimension_semantics=("parallel",),
            vmem_limit_bytes=vmem2),
    )(y_cache, scale.reshape(1, C_out), shift.reshape(1, C_out))

    # Lane-dense channels-last stores in-kernel; the NCL transpose fuses in XLA here.
    return jnp.transpose(out_nlc[:N], (0, 2, 1))


def reference(x, w, b, gamma, beta, stride, pad, pool, eps=1e-5):
    """Pure-JAX reference matching PyTorch training-mode forward (bias included)."""
    y = jax.lax.conv_general_dilated(
        x, w, window_strides=(stride,), padding=[(pad, pad)],
        dimension_numbers=("NCH", "OIH", "NCH"),
    )
    y = y + b[None, :, None]
    mean = jnp.mean(y, axis=(0, 2), keepdims=True)
    var = jnp.mean((y - mean) ** 2, axis=(0, 2), keepdims=True)
    y = (y - mean) / jnp.sqrt(var + eps)
    y = y * gamma[None, :, None] + beta[None, :, None]
    y = jnp.maximum(y, 0.0)
    Lp = y.shape[-1] // pool
    y = y[..., : Lp * pool].reshape(y.shape[0], y.shape[1], Lp, pool)
    return jnp.max(y, axis=-1)


if __name__ == "__main__":
    # Small shapes consistent with the module's forward: x is (N, C_in, L).
    N, C_IN, C_OUT, L = 2, 4, 8, 32
    K, STRIDE, PAD, POOL = 3, 1, 1, 4

    key = jax.random.PRNGKey(0)
    kx, kw, kb, kg, kbe = jax.random.split(key, 5)
    x = jax.random.normal(kx, (N, C_IN, L), jnp.float32)
    # Deterministic synthetic parameters (no checkpoint load).
    w = jax.random.normal(kw, (C_OUT, C_IN, K), jnp.float32) * 0.1
    b = jax.random.normal(kb, (C_OUT,), jnp.float32) * 0.1      # used only by the reference
    gamma = 1.0 + 0.1 * jax.random.normal(kg, (C_OUT,), jnp.float32)
    beta = 0.1 * jax.random.normal(kbe, (C_OUT,), jnp.float32)

    out = conv_block_1d(x, w, gamma, beta, stride=STRIDE, padding=PAD, pool=POOL)
    out = jax.block_until_ready(out)

    ref = reference(x, w, b, gamma, beta, STRIDE, PAD, POOL)
    L_OUT = (L + 2 * PAD - K) // STRIDE + 1
    assert out.shape == (N, C_OUT, L_OUT // POOL), out.shape
    err = float(jnp.max(jnp.abs(out - ref)))
    assert jnp.allclose(out, ref, atol=1e-4, rtol=1e-4), err

    print("KERNEL_OK")
</pallas_src>

<mosaic_0001>
module attributes {stable_mosaic.version = 11 : i64} {
  func.func @_conv_stats_kernel(%arg0: i32, %arg1: memref<80x4xf32, #tpu.memory_space<vmem>>, %arg2: memref<12x8xf32, #tpu.memory_space<vmem>>, %arg3: memref<2x32x8xf32, #tpu.memory_space<vmem>>, %arg4: memref<1x1x8xf32, #tpu.memory_space<vmem>>, %arg5: memref<1x1x8xf32, #tpu.memory_space<vmem>>, %arg6: memref<64x12xf32, #tpu.memory_space<vmem>>) attributes {dimension_semantics = [#tpu.dimension_semantics<parallel>], iteration_bounds = array<i64: 1>, scalar_prefetch = 0 : i64, scratch_operands = 1 : i64, tpu.core_type = #tpu.core_type<tc>, window_params = [{transform_indices = @transform_0, window_bounds = array<i64: 80, 4>}, {pipeline_mode = #tpu.pipeline_mode<synchronous>, transform_indices = @transform_1, window_bounds = array<i64: 12, 8>}, {transform_indices = @transform_2, window_bounds = array<i64: 2, 32, 8>}, {transform_indices = @transform_3, window_bounds = array<i64: 1, 1, 8>}, {transform_indices = @transform_4, window_bounds = array<i64: 1, 1, 8>}]} {
    %c0 = arith.constant 0 : index
    %c0_0 = arith.constant 0 : index
    %0 = tpu.strided_load %arg1[%c0, %c0_0] {strides = array<i32: 4, 1>} : memref<80x4xf32, #tpu.memory_space<vmem>>, vector<8x4xf32>
    %c0_1 = arith.constant 0 : index
    %c0_2 = arith.constant 0 : index
    %1 = vector.load %arg6[%c0_1, %c0_2] : memref<64x12xf32, #tpu.memory_space<vmem>>, vector<8x4xf32>
    tpu.vector_store %arg6[%c0_1, %c0_2], %0 {strides = array<i32>} : memref<64x12xf32, #tpu.memory_space<vmem>>, vector<8x4xf32>,
    %c1 = arith.constant 1 : index
    %c0_3 = arith.constant 0 : index
    %2 = tpu.strided_load %arg1[%c1, %c0_3] {strides = array<i32: 4, 1>} : memref<80x4xf32, #tpu.memory_space<vmem>>, vector<8x4xf32>
    %c0_4 = arith.constant 0 : index
    %c4 = arith.constant 4 : index
    %3 = vector.load %arg6[%c0_4, %c4] : memref<64x12xf32, #tpu.memory_space<vmem>>, vector<8x4xf32>
    tpu.vector_store %arg6[%c0_4, %c4], %2 {strides = array<i32>} : memref<64x12xf32, #tpu.memory_space<vmem>>, vector<8x4xf32>,
    %c2 = arith.constant 2 : index
    %c0_5 = arith.constant 0 : index
    %4 = tpu.strided_load %arg1[%c2, %c0_5] {strides = array<i32: 4, 1>} : memref<80x4xf32, #tpu.memory_space<vmem>>, vector<8x4xf32>
    %c0_6 = arith.constant 0 : index
    %c8 = arith.constant 8 : index
    %5 = vector.load %arg6[%c0_6, %c8] : memref<64x12xf32, #tpu.memory_space<vmem>>, vector<8x4xf32>
    tpu.vector_store %arg6[%c0_6, %c8], %4 {strides = array<i32>} : memref<64x12xf32, #tpu.memory_space<vmem>>, vector<8x4xf32>,
    %c1_7 = arith.constant 1 : index
    %c0_8 = arith.constant 0 : index
    %6 = tpu.strided_load %arg1[%c1_7, %c0_8] {strides = array<i32: 4, 1>} : memref<80x4xf32, #tpu.memory_space<vmem>>, vector<8x4xf32>
    %c8_9 = arith.constant 8 : index
    %c0_10 = arith.constant 0 : index
    %7 = vector.load %arg6[%c8_9, %c0_10] : memref<64x12xf32, #tpu.memory_space<vmem>>, vector<8x4xf32>
    tpu.vector_store %arg6[%c8_9, %c0_10], %6 {strides = array<i32>} : memref<64x12xf32, #tpu.memory_space<vmem>>, vector<8x4xf32>,
    %c2_11 = arith.constant 2 : index
    %c0_12 = arith.constant 0 : index
    %8 = tpu.strided_load %arg1[%c2_11, %c0_12] {strides = array<i32: 4, 1>} : memref<80x4xf32, #tpu.memory_space<vmem>>, vector<8x4xf32>
    %c8_13 = arith.constant 8 : index
    %c4_14 = arith.constant 4 : index
    %9 = vector.load %arg6[%c8_13, %c4_14] : memref<64x12xf32, #tpu.memory_space<vmem>>, vector<8x4xf32>
    tpu.vector_store %arg6[%c8_13, %c4_14], %8 {strides = array<i32>} : memref<64x12xf32, #tpu.memory_space<vmem>>, vector<8x4xf32>,
    %c3 = arith.constant 3 : index
    %c0_15 = arith.constant 0 : index
    %10 = tpu.strided_load %arg1[%c3, %c0_15] {strides = array<i32: 4, 1>} : memref<80x4xf32, #tpu.memory_space<vmem>>, vector<8x4xf32>
    %c8_16 = arith.constant 8 : index
    %c8_17 = arith.constant 8 : index
    %11 = vector.load %arg6[%c8_16, %c8_17] : memref<64x12xf32, #tpu.memory_space<vmem>>, vector<8x4xf32>
    tpu.vector_store %arg6[%c8_16, %c8_17], %10 {strides = array<i32>} : memref<64x12xf32, #tpu.memory_space<vmem>>, vector<8x4xf32>,
    %c2_18 = arith.constant 2 : index
    %c0_19 = arith.constant 0 : index
    %12 = tpu.strided_load %arg1[%c2_18, %c0_19] {strides = array<i32: 4, 1>} : memref<80x4xf32, #tpu.memory_space<vmem>>, vector<8x4xf32>
    %c16 = arith.constant 16 : index
    %c0_20 = arith.constant 0 : index
    %13 = vector.load %arg6[%c16, %c0_20] : memref<64x12xf32, #tpu.memory_space<vmem>>, vector<8x4xf32>
    tpu.vector_store %arg6[%c16, %c0_20], %12 {strides = array<i32>} : memref<64x12xf32, #tpu.memory_space<vmem>>, vector<8x4xf32>,
    %c3_21 = arith.constant 3 : index
    %c0_22 = arith.constant 0 : index
    %14 = tpu.strided_load %arg1[%c3_21, %c0_22] {strides = array<i32: 4, 1>} : memref<80x4xf32, #tpu.memory_space<vmem>>, vector<8x4xf32>
    %c16_23 = arith.constant 16 : index
    %c4_24 = arith.constant 4 : index
    %15 = vector.load %arg6[%c16_23, %c4_24] : memref<64x12xf32, #tpu.memory_space<vmem>>, vector<8x4xf32>
    tpu.vector_store %arg6[%c16_23, %c4_24], %14 {strides = array<i32>} : memref<64x12xf32, #tpu.memory_space<vmem>>, vector<8x4xf32>,
    %c4_25 = arith.constant 4 : index
    %c0_26 = arith.constant 0 : index
    %16 = tpu.strided_load %arg1[%c4_25, %c0_26] {strides = array<i32: 4, 1>} : memref<80x4xf32, #tpu.memory_space<vmem>>, vector<8x4xf32>
    %c16_27 = arith.constant 16 : index
    %c8_28 = arith.constant 8 : index
    %17 = vector.load %arg6[%c16_27, %c8_28] : memref<64x12xf32, #tpu.memory_space<vmem>>, vector<8x4xf32>
    tpu.vector_store %arg6[%c16_27, %c8_28], %16 {strides = array<i32>} : memref<64x12xf32, #tpu.memory_space<vmem>>, vector<8x4xf32>,
    %c3_29 = arith.constant 3 : index
    %c0_30 = arith.constant 0 : index
    %18 = tpu.strided_load %arg1[%c3_29, %c0_30] {strides = array<i32: 4, 1>} : memref<80x4xf32, #tpu.memory_space<vmem>>, vector<8x4xf32>
    %c24 = arith.constant 24 : index
    %c0_31 = arith.constant 0 : index
    %19 = vector.load %arg6[%c24, %c0_31] : memref<64x12xf32, #tpu.memory_space<vmem>>, vector<8x4xf32>
    tpu.vector_store %arg6[%c24, %c0_31], %18 {strides = array<i32>} : memref<64x12xf32, #tpu.memory_space<vmem>>, vector<8x4xf32>,
    %c4_32 = arith.constant 4 : index
    %c0_33 = arith.constant 0 : index
    %20 = tpu.strided_load %arg1[%c4_32, %c0_33] {strides = array<i32: 4, 1>} : memref<80x4xf32, #tpu.memory_space<vmem>>, vector<8x4xf32>
    %c24_34 = arith.constant 24 : index
    %c4_35 = arith.constant 4 : index
    %21 = vector.load %arg6[%c24_34, %c4_35] : memref<64x12xf32, #tpu.memory_space<vmem>>, vector<8x4xf32>
    tpu.vector_store %arg6[%c24_34, %c4_35], %20 {strides = array<i32>} : memref<64x12xf32, #tpu.memory_space<vmem>>, vector<8x4xf32>,
    %c5 = arith.constant 5 : index
    %c0_36 = arith.constant 0 : index
    %22 = tpu.strided_load %arg1[%c5, %c0_36] {strides = array<i32: 4, 1>} : memref<80x4xf32, #tpu.memory_space<vmem>>, vector<8x4xf32>
    %c24_37 = arith.constant 24 : index
    %c8_38 = arith.constant 8 : index
    %23 = vector.load %arg6[%c24_37, %c8_38] : memref<64x12xf32, #tpu.memory_space<vmem>>, vector<8x4xf32>
    tpu.vector_store %arg6[%c24_37, %c8_38], %22 {strides = array<i32>} : memref<64x12xf32, #tpu.memory_space<vmem>>, vector<8x4xf32>,
    %c40 = arith.constant 40 : index
    %c0_39 = arith.constant 0 : index
    %24 = tpu.strided_load %arg1[%c40, %c0_39] {strides = array<i32: 4, 1>} : memref<80x4xf32, #tpu.memory_space<vmem>>, vector<8x4xf32>
    %c32 = arith.constant 32 : index
    %c0_40 = arith.constant 0 : index
    %25 = vector.load %arg6[%c32, %c0_40] : memref<64x12xf32, #tpu.memory_space<vmem>>, vector<8x4xf32>
    tpu.vector_store %arg6[%c32, %c0_40], %24 {strides = array<i32>} : memref<64x12xf32, #tpu.memory_space<vmem>>, vector<8x4xf32>,
    %c41 = arith.constant 41 : index
    %c0_41 = arith.constant 0 : index
    %26 = tpu.strided_load %arg1[%c41, %c0_41] {strides = array<i32: 4, 1>} : memref<80x4xf32, #tpu.memory_space<vmem>>, vector<8x4xf32>
    %c32_42 = arith.constant 32 : index
    %c4_43 = arith.constant 4 : index
    %27 = vector.load %arg6[%c32_42, %c4_43] : memref<64x12xf32, #tpu.memory_space<vmem>>, vector<8x4xf32>
    tpu.vector_store %arg6[%c32_42, %c4_43], %26 {strides = array<i32>} : memref<64x12xf32, #tpu.memory_space<vmem>>, vector<8x4xf32>,
    %c42 = arith.constant 42 : index
    %c0_44 = arith.constant 0 : index
    %28 = tpu.strided_load %arg1[%c42, %c0_44] {strides = array<i32: 4, 1>} : memref<80x4xf32, #tpu.memory_space<vmem>>, vector<8x4xf32>
    %c32_45 = arith.constant 32 : index
    %c8_46 = arith.constant 8 : index
    %29 = vector.load %arg6[%c32_45, %c8_46] : memref<64x12xf32, #tpu.memory_space<vmem>>, vector<8x4xf32>
    tpu.vector_store %arg6[%c32_45, %c8_46], %28 {strides = array<i32>} : memref<64x12xf32, #tpu.memory_space<vmem>>, vector<8x4xf32>,
    %c41_47 = arith.constant 41 : index
    %c0_48 = arith.constant 0 : index
    %30 = tpu.strided_load %arg1[%c41_47, %c0_48] {strides = array<i32: 4, 1>} : memref<80x4xf32, #tpu.memory_space<vmem>>, vector<8x4xf32>
    %c40_49 = arith.constant 40 : index
    %c0_50 = arith.constant 0 : index
    %31 = vector.load %arg6[%c40_49, %c0_50] : memref<64x12xf32, #tpu.memory_space<vmem>>, vector<8x4xf32>
    tpu.vector_store %arg6[%c40_49, %c0_50], %30 {strides = array<i32>} : memref<64x12xf32, #tpu.memory_space<vmem>>, vector<8x4xf32>,
    %c42_51 = arith.constant 42 : index
    %c0_52 = arith.constant 0 : index
    %32 = tpu.strided_load %arg1[%c42_51, %c0_52] {strides = array<i32: 4, 1>} : memref<80x4xf32, #tpu.memory_space<vmem>>, vector<8x4xf32>
    %c40_53 = arith.constant 40 : index
    %c4_54 = arith.constant 4 : index
    %33 = vector.load %arg6[%c40_53, %c4_54] : memref<64x12xf32, #tpu.memory_space<vmem>>, vector<8x4xf32>
    tpu.vector_store %arg6[%c40_53, %c4_54], %32 {strides = array<i32>} : memref<64x12xf32, #tpu.memory_space<vmem>>, vector<8x4xf32>,
    %c43 = arith.constant 43 : index
    %c0_55 = arith.constant 0 : index
    %34 = tpu.strided_load %arg1[%c43, %c0_55] {strides = array<i32: 4, 1>} : memref<80x4xf32, #tpu.memory_space<vmem>>, vector<8x4xf32>
    %c40_56 = arith.constant 40 : index
    %c8_57 = arith.constant 8 : index
    %35 = vector.load %arg6[%c40_56, %c8_57] : memref<64x12xf32, #tpu.memory_space<vmem>>, vector<8x4xf32>
    tpu.vector_store %arg6[%c40_56, %c8_57], %34 {strides = array<i32>} : memref<64x12xf32, #tpu.memory_space<vmem>>, vector<8x4xf32>,
    %c42_58 = arith.constant 42 : index
    %c0_59 = arith.constant 0 : index
    %36 = tpu.strided_load %arg1[%c42_58, %c0_59] {strides = array<i32: 4, 1>} : memref<80x4xf32, #tpu.memory_space<vmem>>, vector<8x4xf32>
    %c48 = arith.constant 48 : index
    %c0_60 = arith.constant 0 : index
    %37 = vector.load %arg6[%c48, %c0_60] : memref<64x12xf32, #tpu.memory_space<vmem>>, vector<8x4xf32>
    tpu.vector_store %arg6[%c48, %c0_60], %36 {strides = array<i32>} : memref<64x12xf32, #tpu.memory_space<vmem>>, vector<8x4xf32>,
    %c43_61 = arith.constant 43 : index
    %c0_62 = arith.constant 0 : index
    %38 = tpu.strided_load %arg1[%c43_61, %c0_62] {strides = array<i32: 4, 1>} : memref<80x4xf32, #tpu.memory_space<vmem>>, vector<8x4xf32>
    %c48_63 = arith.constant 48 : index
    %c4_64 = arith.constant 4 : index
    %39 = vector.load %arg6[%c48_63, %c4_64] : memref<64x12xf32, #tpu.memory_space<vmem>>, vector<8x4xf32>
    tpu.vector_store %arg6[%c48_63, %c4_64], %38 {strides = array<i32>} : memref<64x12xf32, #tpu.memory_space<vmem>>, vector<8x4xf32>,
    %c44 = arith.constant 44 : index
    %c0_65 = arith.constant 0 : index
    %40 = tpu.strided_load %arg1[%c44, %c0_65] {strides = array<i32: 4, 1>} : memref<80x4xf32, #tpu.memory_space<vmem>>, vector<8x4xf32>
    %c48_66 = arith.constant 48 : index
    %c8_67 = arith.constant 8 : index
    %41 = vector.load %arg6[%c48_66, %c8_67] : memref<64x12xf32, #tpu.memory_space<vmem>>, vector<8x4xf32>
    tpu.vector_store %arg6[%c48_66, %c8_67], %40 {strides = array<i32>} : memref<64x12xf32, #tpu.memory_space<vmem>>, vector<8x4xf32>,
    %c43_68 = arith.constant 43 : index
    %c0_69 = arith.constant 0 : index
    %42 = tpu.strided_load %arg1[%c43_68, %c0_69] {strides = array<i32: 4, 1>} : memref<80x4xf32, #tpu.memory_space<vmem>>, vector<8x4xf32>
    %c56 = arith.constant 56 : index
    %c0_70 = arith.constant 0 : index
    %43 = vector.load %arg6[%c56, %c0_70] : memref<64x12xf32, #tpu.memory_space<vmem>>, vector<8x4xf32>
    tpu.vector_store %arg6[%c56, %c0_70], %42 {strides = array<i32>} : memref<64x12xf32, #tpu.memory_space<vmem>>, vector<8x4xf32>,
    %c44_71 = arith.constant 44 : index
    %c0_72 = arith.constant 0 : index
    %44 = tpu.strided_load %arg1[%c44_71, %c0_72] {strides = array<i32: 4, 1>} : memref<80x4xf32, #tpu.memory_space<vmem>>, vector<8x4xf32>
    %c56_73 = arith.constant 56 : index
    %c4_74 = arith.constant 4 : index
    %45 = vector.load %arg6[%c56_73, %c4_74] : memref<64x12xf32, #tpu.memory_space<vmem>>, vector<8x4xf32>
    tpu.vector_store %arg6[%c56_73, %c4_74], %44 {strides = array<i32>} : memref<64x12xf32, #tpu.memory_space<vmem>>, vector<8x4xf32>,
    %c45 = arith.constant 45 : index
    %c0_75 = arith.constant 0 : index
    %46 = tpu.strided_load %arg1[%c45, %c0_75] {strides = array<i32: 4, 1>} : memref<80x4xf32, #tpu.memory_space<vmem>>, vector<8x4xf32>
    %c56_76 = arith.constant 56 : index
    %c8_77 = arith.constant 8 : index
    %47 = vector.load %arg6[%c56_76, %c8_77] : memref<64x12xf32, #tpu.memory_space<vmem>>, vector<8x4xf32>
    tpu.vector_store %arg6[%c56_76, %c8_77], %46 {strides = array<i32>} : memref<64x12xf32, #tpu.memory_space<vmem>>, vector<8x4xf32>,
    %c0_78 = arith.constant 0 : index
    %c0_79 = arith.constant 0 : index
    %48 = vector.load %arg6[%c0_78, %c0_79] : memref<64x12xf32, #tpu.memory_space<vmem>>, vector<64x12xf32>
    %c0_80 = arith.constant 0 : index
    %c0_81 = arith.constant 0 : index
    %49 = vector.load %arg2[%c0_80, %c0_81] : memref<12x8xf32, #tpu.memory_space<vmem>>, vector<12x8xf32>
    %cst = arith.constant dense<0.000000e+00> : vector<64x8xf32>
    %50 = tpu.matmul %48, %49, %cst {dimension_numbers = #tpu.dot_dimension_numbers<[1], [0], [0], [1], [0, 0, 1, 1], [], []>} : vector<64x12xf32>, vector<12x8xf32>, vector<64x8xf32> -> vector<64x8xf32>
    %51 = vector.extract_strided_slice %50 {offsets = [0, 0], sizes = [32, 8], strides = [1, 1]} : vector<64x8xf32> to vector<32x8xf32>
    %c0_82 = arith.constant 0 : index
    %c0_83 = arith.constant 0 : index
    %c0_84 = arith.constant 0 : index
    %52 = vector.load %arg3[%c0_82, %c0_83, %c0_84] : memref<2x32x8xf32, #tpu.memory_space<vmem>>, vector<1x32x8xf32>
    %53 = vector.shape_cast %52 : vector<1x32x8xf32> to vector<32x8xf32>
    %54 = vector.shape_cast %51 : vector<32x8xf32> to vector<1x32x8xf32>
    tpu.vector_store %arg3[%c0_82, %c0_83, %c0_84], %54 {strides = array<i32>} : memref<2x32x8xf32, #tpu.memory_space<vmem>>, vector<1x32x8xf32>,
    %55 = vector.extract_strided_slice %50 {offsets = [32, 0], sizes = [32, 8], strides = [1, 1]} : vector<64x8xf32> to vector<32x8xf32>
    %c1_85 = arith.constant 1 : index
    %c0_86 = arith.constant 0 : index
    %c0_87 = arith.constant 0 : index
    %56 = vector.load %arg3[%c1_85, %c0_86, %c0_87] : memref<2x32x8xf32, #tpu.memory_space<vmem>>, vector<1x32x8xf32>
    %57 = vector.shape_cast %56 : vector<1x32x8xf32> to vector<32x8xf32>
    %58 = vector.shape_cast %55 : vector<32x8xf32> to vector<1x32x8xf32>
    tpu.vector_store %arg3[%c1_85, %c0_86, %c0_87], %58 {strides = array<i32>} : memref<2x32x8xf32, #tpu.memory_space<vmem>>, vector<1x32x8xf32>,
    %cst_88 = arith.constant dense<0.000000e+00> : vector<8xf32>
    %59 = vector.multi_reduction <add>, %50, %cst_88 [0] : vector<64x8xf32> to vector<8xf32>
    %60 = vector.shape_cast %59 : vector<8xf32> to vector<1x8xf32>
    %61 = vector.shape_cast %60 : vector<1x8xf32> to vector<1x1x8xf32>
    %c0_89 = arith.constant 0 : index
    %c0_90 = arith.constant 0 : index
    %c0_91 = arith.constant 0 : index
    %62 = vector.load %arg4[%c0_89, %c0_90, %c0_91] : memref<1x1x8xf32, #tpu.memory_space<vmem>>, vector<1x1x8xf32>
    tpu.vector_store %arg4[%c0_89, %c0_90, %c0_91], %61 {strides = array<i32>} : memref<1x1x8xf32, #tpu.memory_space<vmem>>, vector<1x1x8xf32>,
    %63 = arith.mulf %50, %50 : vector<64x8xf32>
    %cst_92 = arith.constant dense<0.000000e+00> : vector<8xf32>
    %64 = vector.multi_reduction <add>, %63, %cst_92 [0] : vector<64x8xf32> to vector<8xf32>
    %65 = vector.shape_cast %64 : vector<8xf32> to vector<1x8xf32>
    %66 = vector.shape_cast %65 : vector<1x8xf32> to vector<1x1x8xf32>
    %c0_93 = arith.constant 0 : index
    %c0_94 = arith.constant 0 : index
    %c0_95 = arith.constant 0 : index
    %67 = vector.load %arg5[%c0_93, %c0_94, %c0_95] : memref<1x1x8xf32, #tpu.memory_space<vmem>>, vector<1x1x8xf32>
    tpu.vector_store %arg5[%c0_93, %c0_94, %c0_95], %66 {strides = array<i32>} : memref<1x1x8xf32, #tpu.memory_space<vmem>>, vector<1x1x8xf32>,
    return
  }
  func.func @transform_0(%arg0: i32) -> (i32, i32) {
    %c0_i32 = arith.constant 0 : i32
    %c0_i32_0 = arith.constant 0 : i32
    return %arg0, %c0_i32 : i32, i32
  }
  func.func @transform_1(%arg0: i32) -> (i32, i32) {
    %c0_i32 = arith.constant 0 : i32
    %c0_i32_0 = arith.constant 0 : i32
    %c0_i32_1 = arith.constant 0 : i32
    return %c0_i32, %c0_i32_0 : i32, i32
  }
  func.func @transform_2(%arg0: i32) -> (i32, i32, i32) {
    %c0_i32 = arith.constant 0 : i32
    %c0_i32_0 = arith.constant 0 : i32
    %c0_i32_1 = arith.constant 0 : i32
    return %arg0, %c0_i32, %c0_i32_0 : i32, i32, i32
  }
  func.func @transform_3(%arg0: i32) -> (i32, i32, i32) {
    %c0_i32 = arith.constant 0 : i32
    %c0_i32_0 = arith.constant 0 : i32
    %c0_i32_1 = arith.constant 0 : i32
    return %arg0, %c0_i32, %c0_i32_0 : i32, i32, i32
  }
  func.func @transform_4(%arg0: i32) -> (i32, i32, i32) {
    %c0_i32 = arith.constant 0 : i32
    %c0_i32_0 = arith.constant 0 : i32
    %c0_i32_1 = arith.constant 0 : i32
    return %arg0, %c0_i32, %c0_i32_0 : i32, i32, i32
  }
}

</mosaic_0001>

<llo_original>
// kernel: tpu_custom_call.1
$region0: #{tpu_custom_call.1}
  #allocation0 [shape = 'u32[]', space=smem, size = 0x4, offset = 0x4, fixed_abs, tag = 'smem constant byte address 0x4 - core index']
  #allocation1 [shape = 'u32[144,128]{1,0:T(1,128)}', space=vmem, size = 0x12000, scoped, tag = 'internal scratch']
  #allocation2 [shape = 'f32[64,12]{1,0:T(8,128)}', space=vmem, size = 0x8000, scoped, tag = 'scratch operand']
  %s0 = inlined_call_operand.vmem [shape: f32[80,4], index: 0, kind: input, shape index: {}]
  %s1 = inlined_call_operand.vmem [shape: f32[12,8], index: 1, kind: input, shape index: {}]
  %s2 = inlined_call_operand.vmem [shape: f32[2,32,8], index: 2, kind: output, shape index: {0}]
  %s3 = inlined_call_operand.hbm [shape: f32[1,1,8], index: 3, kind: output, shape index: {1}]
  %s4 = inlined_call_operand.hbm [shape: f32[1,1,8], index: 4, kind: output, shape index: {2}]
  %5 = xla_tuple %s2, %s3, %s4
  %s6 = sld [smem:[#allocation0]]
  $region34: #{tpu_custom_call.1} parent=0
    _
  %s8 = ssub.s32 1, %s6
  %s9 = scalar_select 0, %s8, %s6
  $region1: #{tpu_custom_call.1} parent=0
    #allocation3 [shape = 'u8[512]{0}', space=vmem, size = 0x400, scoped, tag = 'output window, operand 1, single buffered']
    #allocation4 [shape = 's32[1]{0}', space=sflag, size = 0x4, scoped, tag = 'scoped memory for tpu_custom_call.1']
    #allocation5 [shape = 'u8[512]{0}', space=vmem, size = 0x400, scoped, tag = 'output window, operand 2, single buffered']
    #allocation6 [shape = 's32[1]{0}', space=sflag, size = 0x4, scoped, tag = 'scoped memory for tpu_custom_call.1']
    %10 = vsyncpa [#allocation4], 0
    %11 = vsyncpa [#allocation6], 0
    // Predicated region
    $region2: #{tpu_custom_call.1} parent=1 // pred_check
      _
    $region3: #{tpu_custom_call.1} parent=1 // pred_check_branch
      %13 = sbr.rel (0) target = $region5
    $region4: #{tpu_custom_call.1} parent=1 // pred_region
      _
    $region5: #{tpu_custom_call.1} parent=1 // pred_fallthru
      _
    // Predicated region
    $region6: #{tpu_custom_call.1} parent=1 // pred_check
      _
    $region7: #{tpu_custom_call.1} parent=1 // pred_check_branch
      %15 = sbr.rel (0) target = $region9
    $region8: #{tpu_custom_call.1} parent=1 // pred_region
      _
    $region9: #{tpu_custom_call.1} parent=1 // pred_fallthru
      _
    %v16 = vld [vmem:[%s0] ss:$4 sm:$0xff]
    %vm17 = vcmask 31744
    %18 = vst.msk [vmem:[#allocation2] sm:$0xff] %vm17, %v16
    %s19 = scalar_lea.vmem %s0, 1
    %v20 = vld [vmem:[%s19] ss:$4 sm:$0xff]
    %22 = vrot.lane.b32.xlu0 %v20, 4
    %v23 = vpop.permute.xlu0 %22
    %vm25 = vcmask 64544
    %26 = vst.msk [vmem:[#allocation2] sm:$0xff] %vm25, %v23
    %s27 = scalar_lea.vmem %s0, 2
    %v28 = vld [vmem:[%s27] ss:$4 sm:$0xff]
    %30 = vrot.lane.b32.xlu0 %v28, 8
    %v31 = vpop.permute.xlu0 %30
    %vm33 = vcmask 97344
    %34 = vst.msk [vmem:[#allocation2] sm:$0xff] %vm33, %v31
    %v35 = vld [vmem:[%s19] ss:$4 sm:$0xff]
    %36 = vst.msk [vmem:[#allocation2 + $0x8] sm:$0xff] %vm17, %v35
    %v37 = vld [vmem:[%s27] ss:$4 sm:$0xff]
    %39 = vrot.lane.b32.xlu0 %v37, 4
    %v40 = vpop.permute.xlu0 %39
    %42 = vst.msk [vmem:[#allocation2 + $0x8] sm:$0xff] %vm25, %v40
    %s43 = scalar_lea.vmem %s0, 3
    %v44 = vld [vmem:[%s43] ss:$4 sm:$0xff]
    %46 = vrot.lane.b32.xlu0 %v44, 8
    %v47 = vpop.permute.xlu0 %46
    %49 = vst.msk [vmem:[#allocation2 + $0x8] sm:$0xff] %vm33, %v47
    %v50 = vld [vmem:[%s27] ss:$4 sm:$0xff]
    %51 = vst.msk [vmem:[#allocation2 + $0x10] sm:$0xff] %vm17, %v50
    %v52 = vld [vmem:[%s43] ss:$4 sm:$0xff]
    %54 = vrot.lane.b32.xlu0 %v52, 4
    %v55 = vpop.permute.xlu0 %54
    %57 = vst.msk [vmem:[#allocation2 + $0x10] sm:$0xff] %vm25, %v55
    %s58 = scalar_lea.vmem %s0, 4
    %v59 = vld [vmem:[%s58] ss:$4 sm:$0xff]
    %61 = vrot.lane.b32.xlu0 %v59, 8
    %v62 = vpop.permute.xlu0 %61
    %64 = vst.msk [vmem:[#allocation2 + $0x10] sm:$0xff] %vm33, %v62
    %v65 = vld [vmem:[%s43] ss:$4 sm:$0xff]
    %66 = vst.msk [vmem:[#allocation2 + $0x18] sm:$0xff] %vm17, %v65
    %v67 = vld [vmem:[%s58] ss:$4 sm:$0xff]
    %69 = vrot.lane.b32.xlu0 %v67, 4
    %v70 = vpop.permute.xlu0 %69
    %72 = vst.msk [vmem:[#allocation2 + $0x18] sm:$0xff] %vm25, %v70
    %s73 = scalar_lea.vmem %s0, 5
    %v74 = vld [vmem:[%s73] ss:$4 sm:$0xff]
    %76 = vrot.lane.b32.xlu0 %v74, 8
    %v77 = vpop.permute.xlu0 %76
    %79 = vst.msk [vmem:[#allocation2 + $0x18] sm:$0xff] %vm33, %v77
    %s80 = scalar_lea.vmem %s0, 40
    %v81 = vld [vmem:[%s80] ss:$4 sm:$0xff]
    %82 = vst.msk [vmem:[#allocation2 + $0x20] sm:$0xff] %vm17, %v81
    %s83 = scalar_lea.vmem %s0, 41
    %v84 = vld [vmem:[%s83] ss:$4 sm:$0xff]
    %86 = vrot.lane.b32.xlu0 %v84, 4
    %v87 = vpop.permute.xlu0 %86
    %89 = vst.msk [vmem:[#allocation2 + $0x20] sm:$0xff] %vm25, %v87
    %s90 = scalar_lea.vmem %s0, 42
    %v91 = vld [vmem:[%s90] ss:$4 sm:$0xff]
    %93 = vrot.lane.b32.xlu0 %v91, 8
    %v94 = vpop.permute.xlu0 %93
    %96 = vst.msk [vmem:[#allocation2 + $0x20] sm:$0xff] %vm33, %v94
    %v97 = vld [vmem:[%s83] ss:$4 sm:$0xff]
    %98 = vst.msk [vmem:[#allocation2 + $0x28] sm:$0xff] %vm17, %v97
    %v99 = vld [vmem:[%s90] ss:$4 sm:$0xff]
    %101 = vrot.lane.b32.xlu0 %v99, 4
    %v102 = vpop.permute.xlu0 %101
    %104 = vst.msk [vmem:[#allocation2 + $0x28] sm:$0xff] %vm25, %v102
    %s105 = scalar_lea.vmem %s0, 43
    %v106 = vld [vmem:[%s105] ss:$4 sm:$0xff]
    %108 = vrot.lane.b32.xlu0 %v106, 8
    %v109 = vpop.permute.xlu0 %108
    %111 = vst.msk [vmem:[#allocation2 + $0x28] sm:$0xff] %vm33, %v109
    %v112 = vld [vmem:[%s90] ss:$4 sm:$0xff]
    %113 = vst.msk [vmem:[#allocation2 + $0x30] sm:$0xff] %vm17, %v112
    %v114 = vld [vmem:[%s105] ss:$4 sm:$0xff]
    %116 = vrot.lane.b32.xlu0 %v114, 4
    %v117 = vpop.permute.xlu0 %116
    %119 = vst.msk [vmem:[#allocation2 + $0x30] sm:$0xff] %vm25, %v117
    %s120 = scalar_lea.vmem %s0, 44
    %v121 = vld [vmem:[%s120] ss:$4 sm:$0xff]
    %123 = vrot.lane.b32.xlu0 %v121, 8
    %v124 = vpop.permute.xlu0 %123
    %126 = vst.msk [vmem:[#allocation2 + $0x30] sm:$0xff] %vm33, %v124
    %v127 = vld [vmem:[%s105] ss:$4 sm:$0xff]
    %128 = vst.msk [vmem:[#allocation2 + $0x38] sm:$0xff] %vm17, %v127
    %v129 = vld [vmem:[%s120] ss:$4 sm:$0xff]
    %131 = vrot.lane.b32.xlu0 %v129, 4
    %v132 = vpop.permute.xlu0 %131
    %134 = vst.msk [vmem:[#allocation2 + $0x38] sm:$0xff] %vm25, %v132
    %s135 = scalar_lea.vmem %s0, 45
    %v136 = vld [vmem:[%s135] ss:$4 sm:$0xff]
    %138 = vrot.lane.b32.xlu0 %v136, 8
    %v139 = vpop.permute.xlu0 %138
    %141 = vst.msk [vmem:[#allocation2 + $0x38] sm:$0xff] %vm33, %v139
    %v142 = vld [vmem:[#allocation2] sm:$0xff]
    %v143 = vld [vmem:[#allocation2 + $0x8] sm:$0xff]
    %v144 = vld [vmem:[#allocation2 + $0x10] sm:$0xff]
    %v145 = vld [vmem:[#allocation2 + $0x18] sm:$0xff]
    %v146 = vld [vmem:[#allocation2 + $0x20] sm:$0xff]
    %v147 = vld [vmem:[#allocation2 + $0x28] sm:$0xff]
    %v148 = vld [vmem:[#allocation2 + $0x30] sm:$0xff]
    %v149 = vld [vmem:[#allocation2 + $0x38] sm:$0xff]
    %v150 = vld [vmem:[%s1] sm:$0xff]
    %v151 = vld [vmem:[%s1 + $0x8] sm:$0xf]
    %vm152 = vcmask 97280
    %v154 = vsel %vm152, %v142, 0
    %v157 = vsel %vm152, %v143, 0
    %v160 = vsel %vm152, %v144, 0
    %v163 = vsel %vm152, %v145, 0
    %v166 = vsel %vm152, %v146, 0
    %v169 = vsel %vm152, %v147, 0
    %v172 = vsel %vm152, %v148, 0
    %v175 = vsel %vm152, %v149, 0
    %vm177 = vcmask 1043456
    %v179 = vsel %vm177, %v151, 0
    %181 = vmatprep.subr.mxu0 0.0
    %182 = vmatpush1.msra.mxu0 0.0
    %183 = vmatprep.subr.mxu0 0.0
    %184 = vmatpush1.msra.mxu0 0.0
    %185 = vmatprep.subr.mxu0 0.0
    %186 = vmatpush1.msra.mxu0 0.0
    %187 = vmatprep.subr.mxu0 0.0
    %188 = vmatpush1.msra.mxu0 0.0
    %189 = vmatprep.subr.mxu0 0.0
    %190 = vmatpush1.msra.mxu0 0.0
    %191 = vmatprep.subr.mxu0 0.0
    %192 = vmatpush1.msra.mxu0 0.0
    %193 = vmatprep.subr.mxu0 0.0
    %194 = vmatpush1.msra.mxu0 0.0
    %195 = vmatprep.subr.mxu0 0.0
    %196 = vmatpush1.msra.mxu0 0.0
    %197 = vmatprep.subr.mxu0 0.0
    %198 = vmatpush1.msra.mxu0 0.0
    %199 = vmatprep.subr.mxu0 0.0
    %200 = vmatpush1.msra.mxu0 0.0
    %201 = vmatprep.subr.mxu0 0.0
    %202 = vmatpush1.msra.mxu0 0.0
    %203 = vmatprep.subr.mxu0 0.0
    %204 = vmatpush1.msra.mxu0 0.0
    %205 = vmatprep.subr.mxu0 0.0
    %206 = vmatpush1.msra.mxu0 0.0
    %207 = vmatprep.subr.mxu0 0.0
    %208 = vmatpush1.msra.mxu0 0.0
    %209 = vmatprep.subr.mxu0 0.0
    %210 = vmatpush1.msra.mxu0 %v179
    %211 = vmatprep.subr.mxu0 0.0
    %212 = vmatpush1.msra.mxu0 %v150
    %213 = vmatprep.subr.mxu0 0.0
    %214 = vmatpush2.msra.mxu0 0.0
    %215 = vmatprep.subr.mxu0 0.0
    %216 = vmatpush2.msra.mxu0 0.0
    %217 = vmatprep.subr.mxu0 0.0
    %218 = vmatpush2.msra.mxu0 0.0
    %219 = vmatprep.subr.mxu0 0.0
    %220 = vmatpush2.msra.mxu0 0.0
    %221 = vmatprep.subr.mxu0 0.0
    %222 = vmatpush2.msra.mxu0 0.0
    %223 = vmatprep.subr.mxu0 0.0
    %224 = vmatpush2.msra.mxu0 0.0
    %225 = vmatprep.subr.mxu0 0.0
    %226 = vmatpush2.msra.mxu0 0.0
    %227 = vmatprep.subr.mxu0 0.0
    %228 = vmatpush2.msra.mxu0 0.0
    %229 = vmatprep.subr.mxu0 0.0
    %230 = vmatpush2.msra.mxu0 0.0
    %231 = vmatprep.subr.mxu0 0.0
    %232 = vmatpush2.msra.mxu0 0.0
    %233 = vmatprep.subr.mxu0 0.0
    %234 = vmatpush2.msra.mxu0 0.0
    %235 = vmatprep.subr.mxu0 0.0
    %236 = vmatpush2.msra.mxu0 0.0
    %237 = vmatprep.subr.mxu0 0.0
    %238 = vmatpush2.msra.mxu0 0.0
    %239 = vmatprep.subr.mxu0 0.0
    %240 = vmatpush2.msra.mxu0 0.0
    %241 = vmatprep.subr.mxu0 0.0
    %242 = vmatpush2.msra.mxu0 0.0
    %243 = vmatprep.subr.mxu0 0.0
    %244 = vmatpush2.msra.mxu0 0.0
    %245 = vmatprep.mubr.f32.mxu0 0.0
    %246 = vmatmul.mubr.f32.gmra.mxu0 %v154
    %v247 = vpop.f32.mrf.mxu0
    %v248 = vadd.f32 0.0, %v247
    %v249 = vpop.f32.mrf.mxu0
    %250 = vmatprep.mubr.f32.mxu0 0.0
    %251 = vmatmul.mubr.f32.gmra.mxu0 %v157
    %v252 = vpop.f32.mrf.mxu0
    %v253 = vadd.f32 0.0, %v252
    %v254 = vpop.f32.mrf.mxu0
    %255 = vmatprep.mubr.f32.mxu0 0.0
    %256 = vmatmul.mubr.f32.gmra.mxu0 %v160
    %v257 = vpop.f32.mrf.mxu0
    %v258 = vadd.f32 0.0, %v257
    %v259 = vpop.f32.mrf.mxu0
    %260 = vmatprep.mubr.f32.mxu0 0.0
    %261 = vmatmul.mubr.f32.gmra.mxu0 %v163
    %v262 = vpop.f32.mrf.mxu0
    %v263 = vadd.f32 0.0, %v262
    %v264 = vpop.f32.mrf.mxu0
    %265 = vmatprep.mubr.f32.mxu0 0.0
    %266 = vmatmul.mubr.f32.gmra.mxu0 %v166
    %v267 = vpop.f32.mrf.mxu0
    %v268 = vadd.f32 0.0, %v267
    %v269 = vpop.f32.mrf.mxu0
    %270 = vmatprep.mubr.f32.mxu0 0.0
    %271 = vmatmul.mubr.f32.gmra.mxu0 %v169
    %v272 = vpop.f32.mrf.mxu0
    %v273 = vadd.f32 0.0, %v272
    %v274 = vpop.f32.mrf.mxu0
    %275 = vmatprep.mubr.f32.mxu0 0.0
    %276 = vmatmul.mubr.f32.gmra.mxu0 %v172
    %v277 = vpop.f32.mrf.mxu0
    %v278 = vadd.f32 0.0, %v277
    %v279 = vpop.f32.mrf.mxu0
    %280 = vmatprep.mubr.f32.mxu0 0.0
    %281 = vmatmul.mubr.f32.gmra.mxu0 %v175
    %v282 = vpop.f32.mrf.mxu0
    %v283 = vadd.f32 0.0, %v282
    %v284 = vpop.f32.mrf.mxu0
    %285 = vdwg.mxu0
    %vm286 = vcmask 64512
    %287 = vst.msk [vmem:[%s2] sm:$0xff] %vm286, %v248
    %288 = vst.msk [vmem:[%s2 + $0x8] sm:$0xff] %vm286, %v253
    %289 = vst.msk [vmem:[%s2 + $0x10] sm:$0xff] %vm286, %v258
    %290 = vst.msk [vmem:[%s2 + $0x18] sm:$0xff] %vm286, %v263
    %s291 = scalar_lea.vmem %s2, 32
    %292 = vst.msk [vmem:[%s291] sm:$0xff] %vm286, %v268
    %293 = vst.msk [vmem:[%s291 + $0x8] sm:$0xff] %vm286, %v273
    %294 = vst.msk [vmem:[%s291 + $0x10] sm:$0xff] %vm286, %v278
    %295 = vst.msk [vmem:[%s291 + $0x18] sm:$0xff] %vm286, %v283
    %v296 = vsel %vm286, %v248, 0.0
    %v297 = vsel %vm286, %v253, 0.0
    %v298 = vadd.f32 %v296, %v297
    %v299 = vsel %vm286, %v258, 0.0
    %v300 = vadd.f32 %v298, %v299
    %v301 = vsel %vm286, %v263, 0.0
    %v302 = vadd.f32 %v300, %v301
    %v303 = vsel %vm286, %v268, 0.0
    %v304 = vadd.f32 %v302, %v303
    %v305 = vsel %vm286, %v273, 0.0
    %v306 = vadd.f32 %v304, %v305
    %v307 = vsel %vm286, %v278, 0.0
    %v308 = vadd.f32 %v306, %v307
    %v309 = vsel %vm286, %v283, 0.0
    %v310 = vadd.f32 %v308, %v309
    %v311 = vrot.slane %v310, 4
    %v312 = vadd.f32 %v310, %v311
    %v313 = vrot.slane %v312, 2
    %v314 = vadd.f32 %v312, %v313
    %v315 = vrot.slane %v314, 1
    %v316 = vadd.f32 %v314, %v315
    %vm317 = vcmask 57344
    %318 = vst.msk [vmem:[#allocation3] sm:$0x1] %vm317, %v316
    %v319 = vmul.f32 %v248, %v248
    %v320 = vmul.f32 %v253, %v253
    %v321 = vmul.f32 %v258, %v258
    %v322 = vmul.f32 %v263, %v263
    %v323 = vmul.f32 %v268, %v268
    %v324 = vmul.f32 %v273, %v273
    %v325 = vmul.f32 %v278, %v278
    %v326 = vmul.f32 %v283, %v283
    %v327 = vsel %vm286, %v319, 0.0
    %v328 = vsel %vm286, %v320, 0.0
    %v329 = vadd.f32 %v327, %v328
    %v330 = vsel %vm286, %v321, 0.0
    %v331 = vadd.f32 %v329, %v330
    %v332 = vsel %vm286, %v322, 0.0
    %v333 = vadd.f32 %v331, %v332
    %v334 = vsel %vm286, %v323, 0.0
    %v335 = vadd.f32 %v333, %v334
    %v336 = vsel %vm286, %v324, 0.0
    %v337 = vadd.f32 %v335, %v336
    %v338 = vsel %vm286, %v325, 0.0
    %v339 = vadd.f32 %v337, %v338
    %v340 = vsel %vm286, %v326, 0.0
    %v341 = vadd.f32 %v339, %v340
    %v342 = vrot.slane %v341, 4
    %v343 = vadd.f32 %v341, %v342
    %v344 = vrot.slane %v343, 2
    %v345 = vadd.f32 %v343, %v344
    %v346 = vrot.slane %v345, 1
    %v347 = vadd.f32 %v345, %v346
    %348 = vst.msk [vmem:[#allocation5] sm:$0x1] %vm317, %v347
    // Predicated region
    $region10: #{tpu_custom_call.1} parent=1 // pred_check
      _
    $region11: #{tpu_custom_call.1} parent=1 // pred_check_branch
      %350 = sbr.rel (0) target = $region13
    $region12: #{tpu_custom_call.1} parent=1 // pred_region
      _
    $region13: #{tpu_custom_call.1} parent=1 // pred_fallthru
      _
    // Predicated region
    $region14: #{tpu_custom_call.1} parent=1 // pred_check
      _
    $region15: #{tpu_custom_call.1} parent=1 // pred_check_branch
      %352 = sbr.rel (0) target = $region17
    $region16: #{tpu_custom_call.1} parent=1 // pred_region
      %s354 = ssub.s32 16, 16
      %355 = vsyncadd [#allocation4], %s354
      %s357 = sshll.u32 [#allocation3], 4
      %s358 = int_to_ptr.vmem [resolvable:$true] %s357
      %360 = dma.vmem_to_hbm [thread:$0]  %s358, 16, %s3, [#allocation4]
    $region17: #{tpu_custom_call.1} parent=1 // pred_fallthru
      _
    // Predicated region
    $region18: #{tpu_custom_call.1} parent=1 // pred_check
      _
    $region19: #{tpu_custom_call.1} parent=1 // pred_check_branch
      %362 = sbr.rel (0) target = $region21
    $region20: #{tpu_custom_call.1} parent=1 // pred_region
      %s364 = ssub.s32 16, 16
      %365 = vsyncadd [#allocation6], %s364
      %s367 = sshll.u32 [#allocation5], 4
      %s368 = int_to_ptr.vmem [resolvable:$true] %s367
      %370 = dma.vmem_to_hbm [thread:$0]  %s368, 16, %s4, [#allocation6]
    $region21: #{tpu_custom_call.1} parent=1 // pred_fallthru
      _
    // Predicated region
    $region22: #{tpu_custom_call.1} parent=1 // pred_check
      _
    $region23: #{tpu_custom_call.1} parent=1 // pred_check_branch
      %372 = sbr.rel (0) target = $region25
    $region24: #{tpu_custom_call.1} parent=1 // pred_region
      _
    $region25: #{tpu_custom_call.1} parent=1 // pred_fallthru
      _
    // Predicated region
    $region26: #{tpu_custom_call.1} parent=1 // pred_check
      _
    $region27: #{tpu_custom_call.1} parent=1 // pred_check_branch
      %374 = sbr.rel (0) target = $region29
    $region28: #{tpu_custom_call.1} parent=1 // pred_region
      %375 = dma.done [#allocation4], 16
    $region29: #{tpu_custom_call.1} parent=1 // pred_fallthru
      _
    // Predicated region
    $region30: #{tpu_custom_call.1} parent=1 // pred_check
      _
    $region31: #{tpu_custom_call.1} parent=1 // pred_check_branch
      %377 = sbr.rel (0) target = $region33
    $region32: #{tpu_custom_call.1} parent=1 // pred_region
      %378 = dma.done [#allocation6], 16
    $region33: #{tpu_custom_call.1} parent=1 // pred_fallthru
      _
    %379 = vsyncpa [#allocation4], 1
    %380 = vsyncpa [#allocation6], 1

</llo_original>
